<compile_context>
chip_gen: v7x
topology: tpu7x:2x2x1
jax: 0.10.0
libtpu: 0.0.40
codegen_flags: <defaults>
</compile_context>

<pallas_src>
from functools import partial

import jax
import jax.numpy as jnp
from jax.experimental import pallas as pl
from jax.experimental.pallas import tpu as pltpu


def _pick_time_tile(T, max_tile):
    """Return (time_tile, padded_T). Tiles are lane-dense (multiple of 128) unless
    a single tile covers the whole (small) T."""
    if T <= max_tile:
        return T, T
    assert max_tile >= 128, "max_time_tile must be >= 128 when T > max_time_tile"
    best = (max_tile // 128) * 128
    for tt in range(best, 127, -128):
        if T % tt == 0:
            return tt, T
    # No lane-dense divisor: pad T up to a multiple of the largest tile; the pad
    # columns carry the reflected continuation so real frames near the right edge
    # stay exact, and the padded frames are cropped in glue.
    return best, ((T + best - 1) // best) * best


@partial(jax.jit, static_argnames=("dilation", "max_time_tile", "out_dtype"))
def resnet_block_pallas(x_ncl, w3_oik, b3, w1_oik, b1, ws_oik, bs, *,
                        dilation, max_time_tile=512, out_dtype=jnp.float32):
    """ResnetBlock forward.

    x_ncl:   (B, C, T) float32 in PyTorch NCL layout.
    w3_oik:  (C, C, 3) weight-norm-folded dilated conv weight (out, in, k).
    w1_oik:  (C, C, 1) final 1x1 conv weight.   ws_oik: (C, C, 1) shortcut weight.
    b3/b1/bs: (C,) biases.
    """
    B, C, T = x_ncl.shape
    d = int(dilation)
    assert d >= 1 and T > d, "ReflectionPad1d needs T > dilation"

    tT, Tp = _pick_time_tile(T, max_time_tile)
    nT = Tp // tT

    # ---------------- glue (all tiny, fused under jit) ----------------
    def _reflect(t):
        t = jnp.where(t < 0, -t, t)
        t = jnp.where(t >= T, 2 * (T - 1) - t, t)
        return jnp.clip(t, 0, T - 1)

    if Tp != T:
        # TODO(synk): only the ragged-T path pays this extra copy of x; common
        # vocoder lengths (T multiple of the tile) take the zero-copy branch.
        tail_idx = _reflect(jnp.arange(T, Tp))
        x_work = jnp.concatenate([x_ncl, x_ncl[:, :, tail_idx]], axis=-1)
    else:
        x_work = x_ncl

    # Per-tile halo columns (left d + right d), gathered straight from x with the
    # reflection applied at the original boundaries.  (B, nT, C, 2d) — tiny.
    starts = jnp.arange(nT) * tT
    offs = jnp.concatenate([jnp.arange(-d, 0), jnp.arange(tT, tT + d)])
    halo_t = _reflect(starts[:, None] + offs[None, :])            # (nT, 2d)
    halo = jnp.transpose(x_ncl[:, :, halo_t], (0, 2, 1, 3))       # (B, nT, C, 2d)

    # Dilated k=3 conv weight, tap-major along the contraction axis: (C, 3C).
    w3_stk = jnp.transpose(w3_oik, (0, 2, 1)).reshape(C, 3 * C).astype(jnp.bfloat16)
    b3_c = b3.reshape(C, 1).astype(jnp.float32)
    # Fused [shortcut 1x1 | final 1x1] weight: (C, 2C), combined bias.
    wsc = jnp.concatenate([ws_oik[:, :, 0], w1_oik[:, :, 0]],
                          axis=1).astype(jnp.bfloat16)
    bsc_c = (bs + b1).reshape(C, 1).astype(jnp.float32)

    # ---------------- kernel ----------------
    def kernel(x_ref, hal_ref, w3_ref, b3_ref, wsc_ref, bsc_ref, o_ref):
        xb = x_ref[0]                                   # (C, tT) f32
        hal = hal_ref[0, 0]                             # (C, 2d) f32
        # Stitch reflected/neighbour halo columns onto this time tile.
        win = jnp.concatenate([hal[:, :d], xb, hal[:, d:]], axis=-1)   # (C, tT+2d)

        # LeakyReLU(0.2) in f32 (v5e VPU has no bf16 ALU), one bf16 cast of the
        # whole window so the misaligned tap slices copy bf16, not f32.
        act = jnp.where(win >= 0.0, win, 0.2 * win).astype(jnp.bfloat16)

        # Dilated k=3 conv: ONE MXU matmul over the 3 taps stacked on sublanes.
        x_stk = jnp.concatenate([act[:, k * d:k * d + tT] for k in range(3)],
                                axis=0)                 # (3C, tT) bf16
        a3 = jnp.dot(w3_ref[...], x_stk,
                     preferred_element_type=jnp.float32) + b3_ref[...]

        # LeakyReLU(0.2), then fused [shortcut | final 1x1] matmul (K = 2C).
        h2 = jnp.where(a3 >= 0.0, a3, 0.2 * a3).astype(jnp.bfloat16)
        z = jnp.concatenate([xb.astype(jnp.bfloat16), h2], axis=0)     # (2C, tT)
        out = jnp.dot(wsc_ref[...], z,
                      preferred_element_type=jnp.float32) + bsc_ref[...]
        o_ref[0] = out.astype(o_ref.dtype)

    out = pl.pallas_call(
        kernel,
        out_shape=jax.ShapeDtypeStruct((B, C, Tp), out_dtype),
        grid_spec=pltpu.PrefetchScalarGridSpec(
            num_scalar_prefetch=0,
            grid=(B, nT),
            in_specs=[
                pl.BlockSpec((1, C, tT), lambda b, t: (b, 0, t)),         # x tile
                pl.BlockSpec((1, 1, C, 2 * d), lambda b, t: (b, t, 0, 0)),  # halos
                pl.BlockSpec((C, 3 * C), lambda b, t: (0, 0)),            # stacked w3
                pl.BlockSpec((C, 1), lambda b, t: (0, 0)),                # b3
                pl.BlockSpec((C, 2 * C), lambda b, t: (0, 0)),            # [ws|w1]
                pl.BlockSpec((C, 1), lambda b, t: (0, 0)),                # bs + b1
            ],
            out_specs=pl.BlockSpec((1, C, tT), lambda b, t: (b, 0, t)),
        ),
        compiler_params=pltpu.CompilerParams(
            dimension_semantics=("parallel", "parallel")),
    )(x_work, halo, w3_stk, b3_c, wsc, bsc_c)

    return out[:, :, :T] if Tp != T else out


def weight_norm_fold(v, g):
    """PyTorch weight_norm (dim=0): w = g * v / ||v|| per output channel."""
    norm = jnp.sqrt(jnp.sum(v * v, axis=tuple(range(1, v.ndim)), keepdims=True))
    return g.reshape((-1,) + (1,) * (v.ndim - 1)) * v / norm


def ref_forward(x_ncl, w3_oik, b3, w1_oik, b1, ws_oik, bs, d):
    """Pure-JAX f32 reference in PyTorch NCL layout using lax conv."""
    def conv1d(x, w, b, dil):
        y = jax.lax.conv_general_dilated(
            x, w, window_strides=(1,), padding="VALID",
            rhs_dilation=(dil,), dimension_numbers=("NCH", "OIH", "NCH"))
        return y + b[None, :, None]

    sc = conv1d(x_ncl, ws_oik, bs, 1)
    h = jnp.where(x_ncl >= 0, x_ncl, 0.2 * x_ncl)
    h = jnp.pad(h, ((0, 0), (0, 0), (d, d)), mode="reflect")
    h = conv1d(h, w3_oik, b3, d)
    h = jnp.where(h >= 0, h, 0.2 * h)
    h = conv1d(h, w1_oik, b1, 1)
    return sc + h


if __name__ == "__main__":
    configs = [
        # (B, C, T, dilation, max_time_tile, out_dtype)
        (2, 32, 16, 2, 512, jnp.float32),    # single time tile per batch element
        (1, 32, 256, 3, 128, jnp.bfloat16),  # 2 lane-dense tiles + bf16 output path
        (1, 16, 200, 2, 128, jnp.float32),   # ragged T -> reflected-tail pad + crop
    ]
    base = jax.random.PRNGKey(0)
    for ci, (B, C, T, dil, max_tile, odt) in enumerate(configs):
        ks = jax.random.split(jax.random.fold_in(base, ci), 9)

        # Deterministic synthetic weight_norm parameters (v + g per conv).
        v3 = 0.1 * jax.random.normal(ks[0], (C, C, 3), jnp.float32)
        g3 = 1.0 + 0.05 * jax.random.normal(ks[1], (C,), jnp.float32)
        b3 = 0.05 * jax.random.normal(ks[2], (C,), jnp.float32)

        v1 = 0.1 * jax.random.normal(ks[3], (C, C, 1), jnp.float32)
        g1 = 1.0 + 0.05 * jax.random.normal(ks[4], (C,), jnp.float32)
        b1 = 0.05 * jax.random.normal(ks[5], (C,), jnp.float32)

        vs = 0.1 * jax.random.normal(ks[6], (C, C, 1), jnp.float32)
        gs = 1.0 + 0.05 * jax.random.normal(ks[7], (C,), jnp.float32)
        bs = 0.05 * jax.random.normal(ks[8], (C,), jnp.float32)

        w3_oik = weight_norm_fold(v3, g3)        # (C, C, 3)
        w1_oik = weight_norm_fold(v1, g1)        # (C, C, 1)
        ws_oik = weight_norm_fold(vs, gs)        # (C, C, 1)

        x_ncl = jax.random.normal(jax.random.fold_in(base, 100 + ci),
                                  (B, C, T), jnp.float32)

        out = resnet_block_pallas(x_ncl, w3_oik, b3, w1_oik, b1, ws_oik, bs,
                                  dilation=dil, max_time_tile=max_tile,
                                  out_dtype=odt)
        out = jax.block_until_ready(out)

        ref = ref_forward(x_ncl, w3_oik, b3, w1_oik, b1, ws_oik, bs, dil)
        assert out.shape == ref.shape == (B, C, T)
        out_f32 = out.astype(jnp.float32)
        max_err = float(jnp.max(jnp.abs(out_f32 - ref)))
        # bf16 matmul operands (f32 accumulation) vs f32 reference -> relaxed tol.
        assert jnp.allclose(out_f32, ref, rtol=3e-2, atol=3e-2), (ci, max_err)

    print("KERNEL_OK")
</pallas_src>

<mosaic_0001>
module attributes {stable_mosaic.version = 11 : i64} {
  func.func @kernel(%arg0: i32, %arg1: i32, %arg2: memref<1x32x16xf32, #tpu.memory_space<vmem>>, %arg3: memref<1x1x32x4xf32, #tpu.memory_space<vmem>>, %arg4: memref<32x96xbf16, #tpu.memory_space<vmem>>, %arg5: memref<32x1xf32, #tpu.memory_space<vmem>>, %arg6: memref<32x64xbf16, #tpu.memory_space<vmem>>, %arg7: memref<32x1xf32, #tpu.memory_space<vmem>>, %arg8: memref<1x32x16xf32, #tpu.memory_space<vmem>>) attributes {dimension_semantics = [#tpu.dimension_semantics<parallel>, #tpu.dimension_semantics<parallel>], iteration_bounds = array<i64: 2, 1>, scalar_prefetch = 0 : i64, scratch_operands = 0 : i64, tpu.core_type = #tpu.core_type<tc>, window_params = [{transform_indices = @transform_0, window_bounds = array<i64: 1, 32, 16>}, {transform_indices = @transform_1, window_bounds = array<i64: 1, 1, 32, 4>}, {pipeline_mode = #tpu.pipeline_mode<synchronous>, transform_indices = @transform_2, window_bounds = array<i64: 32, 96>}, {pipeline_mode = #tpu.pipeline_mode<synchronous>, transform_indices = @transform_3, window_bounds = array<i64: 32, 1>}, {pipeline_mode = #tpu.pipeline_mode<synchronous>, transform_indices = @transform_4, window_bounds = array<i64: 32, 64>}, {pipeline_mode = #tpu.pipeline_mode<synchronous>, transform_indices = @transform_5, window_bounds = array<i64: 32, 1>}, {transform_indices = @transform_6, window_bounds = array<i64: 1, 32, 16>}]} {
    %c0 = arith.constant 0 : index
    %c0_0 = arith.constant 0 : index
    %c0_1 = arith.constant 0 : index
    %0 = vector.load %arg2[%c0, %c0_0, %c0_1] : memref<1x32x16xf32, #tpu.memory_space<vmem>>, vector<1x32x16xf32>
    %1 = vector.shape_cast %0 : vector<1x32x16xf32> to vector<32x16xf32>
    %c0_2 = arith.constant 0 : index
    %c0_3 = arith.constant 0 : index
    %c0_4 = arith.constant 0 : index
    %c0_5 = arith.constant 0 : index
    %2 = vector.load %arg3[%c0_2, %c0_3, %c0_4, %c0_5] : memref<1x1x32x4xf32, #tpu.memory_space<vmem>>, vector<1x1x32x4xf32>
    %3 = vector.shape_cast %2 : vector<1x1x32x4xf32> to vector<32x4xf32>
    %4 = vector.extract_strided_slice %3 {offsets = [0, 0], sizes = [32, 2], strides = [1, 1]} : vector<32x4xf32> to vector<32x2xf32>
    %5 = vector.extract_strided_slice %3 {offsets = [0, 2], sizes = [32, 2], strides = [1, 1]} : vector<32x4xf32> to vector<32x2xf32>
    %6 = tpu.concatenate %4, %1, %5 in 1 : vector<32x2xf32>, vector<32x16xf32>, vector<32x2xf32> -> vector<32x20xf32>
    %cst = arith.constant 0.000000e+00 : f32
    %7 = vector.broadcast %cst : f32 to vector<32x20xf32>
    %8 = arith.cmpf oge, %6, %7 : vector<32x20xf32>
    %cst_6 = arith.constant 2.000000e-01 : f32
    %9 = vector.broadcast %cst_6 : f32 to vector<32x20xf32>
    %10 = arith.mulf %9, %6 : vector<32x20xf32>
    %11 = arith.select %8, %6, %10 : vector<32x20xi1>, vector<32x20xf32>
    %12 = arith.truncf %11 : vector<32x20xf32> to vector<32x20xbf16>
    %13 = vector.extract_strided_slice %12 {offsets = [0, 0], sizes = [32, 16], strides = [1, 1]} : vector<32x20xbf16> to vector<32x16xbf16>
    %14 = vector.extract_strided_slice %12 {offsets = [0, 2], sizes = [32, 16], strides = [1, 1]} : vector<32x20xbf16> to vector<32x16xbf16>
    %15 = vector.extract_strided_slice %12 {offsets = [0, 4], sizes = [32, 16], strides = [1, 1]} : vector<32x20xbf16> to vector<32x16xbf16>
    %16 = tpu.concatenate %13, %14, %15 in 0 : vector<32x16xbf16>, vector<32x16xbf16>, vector<32x16xbf16> -> vector<96x16xbf16>
    %c0_7 = arith.constant 0 : index
    %c0_8 = arith.constant 0 : index
    %17 = vector.load %arg4[%c0_7, %c0_8] : memref<32x96xbf16, #tpu.memory_space<vmem>>, vector<32x96xbf16>
    %cst_9 = arith.constant dense<0.000000e+00> : vector<32x16xf32>
    %18 = tpu.matmul %17, %16, %cst_9 {dimension_numbers = #tpu.dot_dimension_numbers<[1], [0], [0], [1], [0, 0, 1, 1], [], []>} : vector<32x96xbf16>, vector<96x16xbf16>, vector<32x16xf32> -> vector<32x16xf32>
    %c0_10 = arith.constant 0 : index
    %c0_11 = arith.constant 0 : index
    %19 = vector.load %arg5[%c0_10, %c0_11] : memref<32x1xf32, #tpu.memory_space<vmem>>, vector<32x1xf32>
    %20 = vector.broadcast %19 : vector<32x1xf32> to vector<32x16xf32>
    %21 = arith.addf %18, %20 : vector<32x16xf32>
    %cst_12 = arith.constant 0.000000e+00 : f32
    %22 = vector.broadcast %cst_12 : f32 to vector<32x16xf32>
    %23 = arith.cmpf oge, %21, %22 : vector<32x16xf32>
    %cst_13 = arith.constant 2.000000e-01 : f32
    %24 = vector.broadcast %cst_13 : f32 to vector<32x16xf32>
    %25 = arith.mulf %24, %21 : vector<32x16xf32>
    %26 = arith.select %23, %21, %25 : vector<32x16xi1>, vector<32x16xf32>
    %27 = arith.truncf %26 : vector<32x16xf32> to vector<32x16xbf16>
    %28 = arith.truncf %1 : vector<32x16xf32> to vector<32x16xbf16>
    %29 = tpu.concatenate %28, %27 in 0 : vector<32x16xbf16>, vector<32x16xbf16> -> vector<64x16xbf16>
    %c0_14 = arith.constant 0 : index
    %c0_15 = arith.constant 0 : index
    %30 = vector.load %arg6[%c0_14, %c0_15] : memref<32x64xbf16, #tpu.memory_space<vmem>>, vector<32x64xbf16>
    %cst_16 = arith.constant dense<0.000000e+00> : vector<32x16xf32>
    %31 = tpu.matmul %30, %29, %cst_16 {dimension_numbers = #tpu.dot_dimension_numbers<[1], [0], [0], [1], [0, 0, 1, 1], [], []>} : vector<32x64xbf16>, vector<64x16xbf16>, vector<32x16xf32> -> vector<32x16xf32>
    %c0_17 = arith.constant 0 : index
    %c0_18 = arith.constant 0 : index
    %32 = vector.load %arg7[%c0_17, %c0_18] : memref<32x1xf32, #tpu.memory_space<vmem>>, vector<32x1xf32>
    %33 = vector.broadcast %32 : vector<32x1xf32> to vector<32x16xf32>
    %34 = arith.addf %31, %33 : vector<32x16xf32>
    %c0_19 = arith.constant 0 : index
    %c0_20 = arith.constant 0 : index
    %c0_21 = arith.constant 0 : index
    %35 = vector.load %arg8[%c0_19, %c0_20, %c0_21] : memref<1x32x16xf32, #tpu.memory_space<vmem>>, vector<1x32x16xf32>
    %36 = vector.shape_cast %35 : vector<1x32x16xf32> to vector<32x16xf32>
    %37 = vector.shape_cast %34 : vector<32x16xf32> to vector<1x32x16xf32>
    tpu.vector_store %arg8[%c0_19, %c0_20, %c0_21], %37 {strides = array<i32>} : memref<1x32x16xf32, #tpu.memory_space<vmem>>, vector<1x32x16xf32>,
    return
  }
  func.func @transform_0(%arg0: i32, %arg1: i32) -> (i32, i32, i32) {
    %c0_i32 = arith.constant 0 : i32
    %c0_i32_0 = arith.constant 0 : i32
    return %arg0, %c0_i32, %arg1 : i32, i32, i32
  }
  func.func @transform_1(%arg0: i32, %arg1: i32) -> (i32, i32, i32, i32) {
    %c0_i32 = arith.constant 0 : i32
    %c0_i32_0 = arith.constant 0 : i32
    %c0_i32_1 = arith.constant 0 : i32
    return %arg0, %arg1, %c0_i32, %c0_i32_0 : i32, i32, i32, i32
  }
  func.func @transform_2(%arg0: i32, %arg1: i32) -> (i32, i32) {
    %c0_i32 = arith.constant 0 : i32
    %c0_i32_0 = arith.constant 0 : i32
    %c0_i32_1 = arith.constant 0 : i32
    return %c0_i32, %c0_i32_0 : i32, i32
  }
  func.func @transform_3(%arg0: i32, %arg1: i32) -> (i32, i32) {
    %c0_i32 = arith.constant 0 : i32
    %c0_i32_0 = arith.constant 0 : i32
    %c0_i32_1 = arith.constant 0 : i32
    return %c0_i32, %c0_i32_0 : i32, i32
  }
  func.func @transform_4(%arg0: i32, %arg1: i32) -> (i32, i32) {
    %c0_i32 = arith.constant 0 : i32
    %c0_i32_0 = arith.constant 0 : i32
    %c0_i32_1 = arith.constant 0 : i32
    return %c0_i32, %c0_i32_0 : i32, i32
  }
  func.func @transform_5(%arg0: i32, %arg1: i32) -> (i32, i32) {
    %c0_i32 = arith.constant 0 : i32
    %c0_i32_0 = arith.constant 0 : i32
    %c0_i32_1 = arith.constant 0 : i32
    return %c0_i32, %c0_i32_0 : i32, i32
  }
  func.func @transform_6(%arg0: i32, %arg1: i32) -> (i32, i32, i32) {
    %c0_i32 = arith.constant 0 : i32
    %c0_i32_0 = arith.constant 0 : i32
    return %arg0, %c0_i32, %arg1 : i32, i32, i32
  }
}

</mosaic_0001>

<llo_original>
// kernel: resnet_block_pallas.1
$region0: #{resnet_block_pallas.1}
  #allocation0 [shape = 'u32[]', space=smem, size = 0x4, offset = 0x4, fixed_abs, tag = 'smem constant byte address 0x4 - core index']
  #allocation1 [shape = 'u32[144,128]{1,0:T(1,128)}', space=vmem, size = 0x12000, scoped, tag = 'internal scratch']
  %s0 = inlined_call_operand.vmem [shape: f32[2,32,16], index: 0, kind: input, shape index: {}]
  %s1 = inlined_call_operand.vmem [shape: f32[2,1,32,4], index: 1, kind: input, shape index: {}]
  %s2 = inlined_call_operand.vmem [shape: bf16[32,96], index: 2, kind: input, shape index: {}]
  %s3 = inlined_call_operand.vmem [shape: f32[32,1], index: 3, kind: input, shape index: {}]
  %s4 = inlined_call_operand.vmem [shape: bf16[32,64], index: 4, kind: input, shape index: {}]
  %s5 = inlined_call_operand.vmem [shape: f32[32,1], index: 5, kind: input, shape index: {}]
  %s6 = inlined_call_operand.vmem [shape: f32[2,32,16], index: 6, kind: output, shape index: {}]
  %s7 = sld [smem:[#allocation0]]
  $region57: #{resnet_block_pallas.1} parent=0
    _
  %s9 = ssub.s32 1, %s7
  %s10 = scalar_select 0, %s9, %s7
  loop: start=0, step=1, limit=4
  $region2: #{resnet_block_pallas.1} parent=0 // loop_pre_header
    _
  $region3: #{resnet_block_pallas.1} parent=0 // loop_header
    %s12 = sphi 0, %s16
    %p13 = scmp.ge.s32.totalorder %s12, 4
    %s19 = sphi 0, %s31
    %s20 = sphi 0, %s27
    %s21 = sphi 0, %s19
    %s22 = sphi 0, %s20
    %s23 = sphi 0, %s21
    %s24 = sphi 0, %s22
    %s36 = sphi 0, %s38
    %s39 = sphi 0, %s36
    %s40 = sphi 0, %s39
    %s56 = sphi 0, %s40
    %s64 = sphi 0, %s66
    %s67 = sphi 0, %s64
    %s68 = sphi 0, %s67
    %s84 = sphi 0, %s68
    %s88 = sphi 0, %s88
    %s90 = sphi 0, %s88
    %s91 = sphi 0, %s90
    %s105 = sphi 0, %s91
    %s109 = sphi 0, %s109
    %s111 = sphi 0, %s109
    %s112 = sphi 0, %s111
    %s126 = sphi 0, %s112
    %s130 = sphi 0, %s130
    %s132 = sphi 0, %s130
    %s133 = sphi 0, %s132
    %s147 = sphi 0, %s133
    %s151 = sphi 0, %s151
    %s153 = sphi 0, %s151
    %s154 = sphi 0, %s153
    %s168 = sphi 0, %s154
    %s176 = sphi 0, %s178
    %s179 = sphi 0, %s176
    %s180 = sphi 0, %s179
    %s196 = sphi 0, %s180
  $region4: #{resnet_block_pallas.1} parent=0 // loop_header_branch
    %15 = sbr.rel (%p13) target = $region8
  $region5: #{resnet_block_pallas.1} parent=0 // loop_body
    %s17 = ssub.s32 %s12, 1
    %s18 = ssub.s32 %s12, 2
    %s25 = sadd.s32 1, %s20
    %p26 = scmp.ge.s32.totalorder %s25, 1
    %s27 = scalar_select %p26, 0, %s25
    %s28 = sadd.s32 1, %s19
    %s29 = scalar_select %p26, %s28, %s19
    %p30 = scmp.ge.s32.totalorder %s29, 2
    %s31 = scalar_select %p30, 0, %s29
    %s32 = ssub.s32 %s19, %s31
    %s33 = ssub.s32 %s20, %s27
    %s34 = sor.u32 %s32, %s33
    %p35 = scmp.eq.s32.totalorder %s34, 0
    %s37 = sadd.s32 %s36, 1
    %s38 = scalar_select %p35, %s36, %s37
    %p41 = pneg %p35
    %p42 = scmp.eq.s32.totalorder %s12, 1
    %p43 = por %p41, %p42
    %p44 = scmp.ne.s32.totalorder %s36, %s39
    %p45 = scmp.eq.s32.totalorder %s12, 0
    %p46 = por %p44, %p45
    %p47 = scmp.ne.s32.totalorder %s36, %s39
    %p48 = scmp.eq.s32.totalorder %s17, 1
    %p49 = por %p47, %p48
    %p50 = scmp.ne.s32.totalorder %s39, %s40
    %p51 = scmp.eq.s32.totalorder %s17, 0
    %p52 = por %p50, %p51
    %p53 = scmp.ne.s32.totalorder %s39, %s40
    %p54 = scmp.eq.s32.totalorder %s18, 1
    %p55 = por %p53, %p54
    %p57 = scmp.ne.s32.totalorder %s40, %s56
    %p58 = scmp.eq.s32.totalorder %s18, 0
    %p59 = por %p57, %p58
    %s60 = ssub.s32 %s19, %s31
    %s61 = ssub.s32 %s20, %s27
    %s62 = sor.u32 %s60, %s61
    %p63 = scmp.eq.s32.totalorder %s62, 0
    %s65 = sadd.s32 %s64, 1
    %s66 = scalar_select %p63, %s64, %s65
    %p69 = pneg %p63
    %p70 = scmp.eq.s32.totalorder %s12, 1
    %p71 = por %p69, %p70
    %p72 = scmp.ne.s32.totalorder %s64, %s67
    %p73 = scmp.eq.s32.totalorder %s12, 0
    %p74 = por %p72, %p73
    %p75 = scmp.ne.s32.totalorder %s64, %s67
    %p76 = scmp.eq.s32.totalorder %s17, 1
    %p77 = por %p75, %p76
    %p78 = scmp.ne.s32.totalorder %s67, %s68
    %p79 = scmp.eq.s32.totalorder %s17, 0
    %p80 = por %p78, %p79
    %p81 = scmp.ne.s32.totalorder %s67, %s68
    %p82 = scmp.eq.s32.totalorder %s18, 1
    %p83 = por %p81, %p82
    %p85 = scmp.ne.s32.totalorder %s68, %s84
    %p86 = scmp.eq.s32.totalorder %s18, 0
    %p87 = por %p85, %p86
    %s89 = sadd.s32 %s88, 1
    %p92 = scmp.eq.s32.totalorder %s12, 1
    %p93 = scmp.ne.s32.totalorder %s88, %s90
    %p94 = scmp.eq.s32.totalorder %s12, 0
    %p95 = por %p93, %p94
    %p96 = scmp.ne.s32.totalorder %s88, %s90
    %p97 = scmp.eq.s32.totalorder %s17, 1
    %p98 = por %p96, %p97
    %p99 = scmp.ne.s32.totalorder %s90, %s91
    %p100 = scmp.eq.s32.totalorder %s17, 0
    %p101 = por %p99, %p100
    %p102 = scmp.ne.s32.totalorder %s90, %s91
    %p103 = scmp.eq.s32.totalorder %s18, 1
    %p104 = por %p102, %p103
    %p106 = scmp.ne.s32.totalorder %s91, %s105
    %p107 = scmp.eq.s32.totalorder %s18, 0
    %p108 = por %p106, %p107
    %s110 = sadd.s32 %s109, 1
    %p113 = scmp.eq.s32.totalorder %s12, 1
    %p114 = scmp.ne.s32.totalorder %s109, %s111
    %p115 = scmp.eq.s32.totalorder %s12, 0
    %p116 = por %p114, %p115
    %p117 = scmp.ne.s32.totalorder %s109, %s111
    %p118 = scmp.eq.s32.totalorder %s17, 1
    %p119 = por %p117, %p118
    %p120 = scmp.ne.s32.totalorder %s111, %s112
    %p121 = scmp.eq.s32.totalorder %s17, 0
    %p122 = por %p120, %p121
    %p123 = scmp.ne.s32.totalorder %s111, %s112
    %p124 = scmp.eq.s32.totalorder %s18, 1
    %p125 = por %p123, %p124
    %p127 = scmp.ne.s32.totalorder %s112, %s126
    %p128 = scmp.eq.s32.totalorder %s18, 0
    %p129 = por %p127, %p128
    %s131 = sadd.s32 %s130, 1
    %p134 = scmp.eq.s32.totalorder %s12, 1
    %p135 = scmp.ne.s32.totalorder %s130, %s132
    %p136 = scmp.eq.s32.totalorder %s12, 0
    %p137 = por %p135, %p136
    %p138 = scmp.ne.s32.totalorder %s130, %s132
    %p139 = scmp.eq.s32.totalorder %s17, 1
    %p140 = por %p138, %p139
    %p141 = scmp.ne.s32.totalorder %s132, %s133
    %p142 = scmp.eq.s32.totalorder %s17, 0
    %p143 = por %p141, %p142
    %p144 = scmp.ne.s32.totalorder %s132, %s133
    %p145 = scmp.eq.s32.totalorder %s18, 1
    %p146 = por %p144, %p145
    %p148 = scmp.ne.s32.totalorder %s133, %s147
    %p149 = scmp.eq.s32.totalorder %s18, 0
    %p150 = por %p148, %p149
    %s152 = sadd.s32 %s151, 1
    %p155 = scmp.eq.s32.totalorder %s12, 1
    %p156 = scmp.ne.s32.totalorder %s151, %s153
    %p157 = scmp.eq.s32.totalorder %s12, 0
    %p158 = por %p156, %p157
    %p159 = scmp.ne.s32.totalorder %s151, %s153
    %p160 = scmp.eq.s32.totalorder %s17, 1
    %p161 = por %p159, %p160
    %p162 = scmp.ne.s32.totalorder %s153, %s154
    %p163 = scmp.eq.s32.totalorder %s17, 0
    %p164 = por %p162, %p163
    %p165 = scmp.ne.s32.totalorder %s153, %s154
    %p166 = scmp.eq.s32.totalorder %s18, 1
    %p167 = por %p165, %p166
    %p169 = scmp.ne.s32.totalorder %s154, %s168
    %p170 = scmp.eq.s32.totalorder %s18, 0
    %p171 = por %p169, %p170
    %s172 = ssub.s32 %s19, %s31
    %s173 = ssub.s32 %s20, %s27
    %s174 = sor.u32 %s172, %s173
    %p175 = scmp.eq.s32.totalorder %s174, 0
    %s177 = sadd.s32 %s176, 1
    %s178 = scalar_select %p175, %s176, %s177
    %p181 = pneg %p175
    %p182 = scmp.eq.s32.totalorder %s12, 1
    %p183 = por %p181, %p182
    %p184 = scmp.ne.s32.totalorder %s176, %s179
    %p185 = scmp.eq.s32.totalorder %s12, 0
    %p186 = por %p184, %p185
    %p187 = scmp.ne.s32.totalorder %s176, %s179
    %p188 = scmp.eq.s32.totalorder %s17, 1
    %p189 = por %p187, %p188
    %p190 = scmp.ne.s32.totalorder %s179, %s180
    %p191 = scmp.eq.s32.totalorder %s17, 0
    %p192 = por %p190, %p191
    %p193 = scmp.ne.s32.totalorder %s179, %s180
    %p194 = scmp.eq.s32.totalorder %s18, 1
    %p195 = por %p193, %p194
    %p197 = scmp.ne.s32.totalorder %s180, %s196
    %p198 = scmp.eq.s32.totalorder %s18, 0
    %p199 = por %p197, %p198
    %p200 = scmp.le.s32.totalorder 1, %s12
    %p201 = scmp.lt.s32.totalorder %s12, 3
    %p202 = pnand %p200, %p201
    %p203 = pneg %p202
    // Predicated region
    $region9: #{resnet_block_pallas.1} parent=5 // pred_check
      _
    $region10: #{resnet_block_pallas.1} parent=5 // pred_check_branch
      %205 = sbr.rel (%p202) target = $region12
    $region11: #{resnet_block_pallas.1} parent=5 // pred_region
      %s206 = ssub.s32 %s12, 1
      // Predicated region
      $region13: #{resnet_block_pallas.1} parent=11 // pred_check
        %p207 = pneg %p101
      $region14: #{resnet_block_pallas.1} parent=11 // pred_check_branch
        %209 = sbr.rel (%p207) target = $region16
      $region15: #{resnet_block_pallas.1} parent=11 // pred_region
        _
      $region16: #{resnet_block_pallas.1} parent=11 // pred_fallthru
        _
      // Predicated region
      $region17: #{resnet_block_pallas.1} parent=11 // pred_check
        %p210 = pneg %p122
      $region18: #{resnet_block_pallas.1} parent=11 // pred_check_branch
        %212 = sbr.rel (%p210) target = $region20
      $region19: #{resnet_block_pallas.1} parent=11 // pred_region
        _
      $region20: #{resnet_block_pallas.1} parent=11 // pred_fallthru
        _
      // Predicated region
      $region21: #{resnet_block_pallas.1} parent=11 // pred_check
        %p213 = pneg %p143
      $region22: #{resnet_block_pallas.1} parent=11 // pred_check_branch
        %215 = sbr.rel (%p213) target = $region24
      $region23: #{resnet_block_pallas.1} parent=11 // pred_region
        _
      $region24: #{resnet_block_pallas.1} parent=11 // pred_fallthru
        _
      // Predicated region
      $region25: #{resnet_block_pallas.1} parent=11 // pred_check
        %p216 = pneg %p164
      $region26: #{resnet_block_pallas.1} parent=11 // pred_check_branch
        %218 = sbr.rel (%p216) target = $region28
      $region27: #{resnet_block_pallas.1} parent=11 // pred_region
        _
      $region28: #{resnet_block_pallas.1} parent=11 // pred_fallthru
        _
    $region12: #{resnet_block_pallas.1} parent=5 // pred_fallthru
      _
    %p219 = scmp.lt.s32.totalorder %s12, 2
    // Predicated region
    $region29: #{resnet_block_pallas.1} parent=5 // pred_check
      %p220 = pneg %p219
    $region30: #{resnet_block_pallas.1} parent=5 // pred_check_branch
      %222 = sbr.rel (%p220) target = $region32
    $region31: #{resnet_block_pallas.1} parent=5 // pred_region
      // Predicated region
      $region33: #{resnet_block_pallas.1} parent=31 // pred_check
        %p223 = pneg %p46
      $region34: #{resnet_block_pallas.1} parent=31 // pred_check_branch
        %225 = sbr.rel (%p223) target = $region36
      $region35: #{resnet_block_pallas.1} parent=31 // pred_region
        %p226 = scmp.lt.s32.totalorder %s19, 1
        %s227 = scalar_select %p226, %s19, 1
        %p228 = scmp.lt.s32.totalorder %s20, 0
        %s229 = scalar_select %p228, %s20, 0
        %s230 = smul.addr %s227, 4
        %s231 = sadd.s32 %s229, %s230
        %s232 = smul.addr %s231, 8
        %s233 = scalar_lea.vmem %s0, %s232
      $region36: #{resnet_block_pallas.1} parent=31 // pred_fallthru
        _
      // Predicated region
      $region37: #{resnet_block_pallas.1} parent=31 // pred_check
        %p234 = pneg %p74
      $region38: #{resnet_block_pallas.1} parent=31 // pred_check_branch
        %236 = sbr.rel (%p234) target = $region40
      $region39: #{resnet_block_pallas.1} parent=31 // pred_region
        %p237 = scmp.lt.s32.totalorder %s19, 1
        %s238 = scalar_select %p237, %s19, 1
        %p239 = scmp.lt.s32.totalorder %s20, 0
        %s240 = scalar_select %p239, %s20, 0
        %s241 = smul.addr %s240, 4
        %s242 = smul.addr %s238, 4
        %s243 = sadd.s32 %s241, %s242
        %s244 = smul.addr %s243, 8
        %s245 = scalar_lea.vmem %s1, %s244
      $region40: #{resnet_block_pallas.1} parent=31 // pred_fallthru
        _
    $region32: #{resnet_block_pallas.1} parent=5 // pred_fallthru
      _
    %p246 = scmp.le.s32.totalorder 1, %s12
    %p247 = scmp.lt.s32.totalorder %s12, 3
    %p248 = pnand %p246, %p247
    %p249 = pneg %p248
    // Predicated region
    $region41: #{resnet_block_pallas.1} parent=5 // pred_check
      _
    $region42: #{resnet_block_pallas.1} parent=5 // pred_check_branch
      %251 = sbr.rel (%p248) target = $region44
    $region43: #{resnet_block_pallas.1} parent=5 // pred_region
      %s252 = ssub.s32 %s12, 1
      %p253 = scmp.lt.s32.totalorder %s21, 1
      %s254 = scalar_select %p253, %s21, 1
      %p255 = scmp.lt.s32.totalorder %s22, 0
      %s256 = scalar_select %p255, %s22, 0
      %s257 = smul.addr %s254, 4
      %s258 = sadd.s32 %s256, %s257
      %s259 = smul.addr %s258, 8
      %s260 = scalar_lea.vmem %s0, %s259
      %p261 = pneg %p52
      %p262 = pneg %p49
      %p263 = scmp.lt.s32.totalorder %s21, 1
      %s264 = scalar_select %p263, %s21, 1
      %p265 = scmp.lt.s32.totalorder %s22, 0
      %s266 = scalar_select %p265, %s22, 0
      %s267 = smul.addr %s266, 4
      %s268 = smul.addr %s264, 4
      %s269 = sadd.s32 %s267, %s268
      %s270 = smul.addr %s269, 8
      %s271 = scalar_lea.vmem %s1, %s270
      %p272 = pneg %p80
      %p273 = pneg %p77
      %p274 = pneg %p101
      %p275 = pneg %p98
      %p276 = pneg %p122
      %p277 = pneg %p119
      %p278 = pneg %p143
      %p279 = pneg %p140
      %p280 = pneg %p164
      %p281 = pneg %p161
      %p282 = pneg %p192
      %p283 = pneg %p189
      %p284 = scmp.lt.s32.totalorder %s21, 1
      %s285 = scalar_select %p284, %s21, 1
      %p286 = scmp.lt.s32.totalorder %s22, 0
      %s287 = scalar_select %p286, %s22, 0
      %s288 = smul.addr %s285, 4
      %s289 = sadd.s32 %s287, %s288
      %s290 = smul.addr %s289, 8
      %s291 = scalar_lea.vmem %s6, %s290
      %p292 = scmp.lt.s32.totalorder %s21, 1
      %s293 = scalar_select %p292, %s21, 1
      %p294 = scmp.lt.s32.totalorder %s22, 0
      %s295 = scalar_select %p294, %s22, 0
      %s296 = smul.addr %s293, 4
      %s297 = sadd.s32 %s295, %s296
      %s298 = smul.addr %s297, 8
      %s299 = scalar_lea.vmem %s0, %s298
      %p300 = scmp.lt.s32.totalorder %s21, 1
      %s301 = scalar_select %p300, %s21, 1
      %p302 = scmp.lt.s32.totalorder %s22, 0
      %s303 = scalar_select %p302, %s22, 0
      %s304 = smul.addr %s303, 4
      %s305 = smul.addr %s301, 4
      %s306 = sadd.s32 %s304, %s305
      %s307 = smul.addr %s306, 8
      %s308 = scalar_lea.vmem %s1, %s307
      %p309 = scmp.lt.s32.totalorder %s21, 1
      %s310 = scalar_select %p309, %s21, 1
      %p311 = scmp.lt.s32.totalorder %s22, 0
      %s312 = scalar_select %p311, %s22, 0
      %s313 = smul.addr %s310, 4
      %s314 = sadd.s32 %s312, %s313
      %s315 = smul.addr %s314, 8
      %s316 = scalar_lea.vmem %s6, %s315
      %v318 = vld [vmem:[%s299] sm:$0xff]
      %v319 = vld [vmem:[%s299 + $0x8] sm:$0xff]
      %v320 = vld [vmem:[%s299 + $0x10] sm:$0xff]
      %v321 = vld [vmem:[%s299 + $0x18] sm:$0xff]
      %v322 = vld [vmem:[%s308] sm:$0xff]
      %v323 = vld [vmem:[%s308 + $0x8] sm:$0xff]
      %v324 = vld [vmem:[%s308 + $0x10] sm:$0xff]
      %v325 = vld [vmem:[%s308 + $0x18] sm:$0xff]
      %330 = vrot.lane.b32.xlu0 %v318, 2
      %v331 = vpop.permute.xlu0 %330
      %332 = vrot.lane.b32.xlu0 %v319, 2
      %v333 = vpop.permute.xlu0 %332
      %334 = vrot.lane.b32.xlu0 %v320, 2
      %v335 = vpop.permute.xlu0 %334
      %336 = vrot.lane.b32.xlu0 %v321, 2
      %v337 = vpop.permute.xlu0 %336
      %346 = vrot.lane.b32.xlu0 %v322, 16
      %v347 = vpop.permute.xlu0 %346
      %348 = vrot.lane.b32.xlu0 %v323, 16
      %v349 = vpop.permute.xlu0 %348
      %350 = vrot.lane.b32.xlu0 %v324, 16
      %v351 = vpop.permute.xlu0 %350
      %352 = vrot.lane.b32.xlu0 %v325, 16
      %v353 = vpop.permute.xlu0 %352
      %vm358 = vcmask 15360
      %v359 = vsel %vm358, %v322, %v331
      %v360 = vsel %vm358, %v323, %v333
      %v361 = vsel %vm358, %v324, %v335
      %v362 = vsel %vm358, %v325, %v337
      %vm363 = vcmask 146432
      %v364 = vsel %vm363, %v359, %v347
      %v365 = vsel %vm363, %v360, %v349
      %v366 = vsel %vm363, %v361, %v351
      %v367 = vsel %vm363, %v362, %v353
      %vm368 = vcmp.ge.f32.partialorder %v364, 0.0
      %vm369 = vcmp.ge.f32.partialorder %v365, 0.0
      %vm370 = vcmp.ge.f32.partialorder %v366, 0.0
      %vm371 = vcmp.ge.f32.partialorder %v367, 0.0
      %v372 = vmul.f32 %v364, 0.2
      %v373 = vmul.f32 %v365, 0.2
      %v374 = vmul.f32 %v366, 0.2
      %v375 = vmul.f32 %v367, 0.2
      %v376 = vsel %vm368, %v364, %v372
      %v377 = vsel %vm369, %v365, %v373
      %v378 = vsel %vm370, %v366, %v374
      %v379 = vsel %vm371, %v367, %v375
      %v380 = vpack.c.bf16 %v377, %v376
      %v381 = vpack.c.bf16 %v379, %v378
      %384 = vrot.lane.b32.xlu0 %v380, 126
      %v385 = vpop.permute.xlu0 %384
      %386 = vrot.lane.b32.xlu0 %v381, 126
      %v387 = vpop.permute.xlu0 %386
      %390 = vrot.lane.b32.xlu0 %v380, 124
      %v391 = vpop.permute.xlu0 %390
      %392 = vrot.lane.b32.xlu0 %v381, 124
      %v393 = vpop.permute.xlu0 %392
      %v396 = vld [vmem:[%s2] sm:$0xf]
      %v397 = vld [vmem:[%s2 + $0x4] sm:$0xf]
      %v398 = vld [vmem:[%s2 + $0x8] sm:$0xf]
      %v399 = vld [vmem:[%s2 + $0xc] sm:$0xf]
      %v400 = vld [vmem:[%s3] sm:$0xff]
      %v401 = vld [vmem:[%s3 + $0x8] sm:$0xff]
      %v402 = vld [vmem:[%s3 + $0x10] sm:$0xff]
      %v403 = vld [vmem:[%s3 + $0x18] sm:$0xff]
      %405 = vset.pattern.permute.xlu0 0
      %406 = vperm.xlu0 %405, %v400
      %v407 = vpop.permute.xlu0 %406
      %410 = vset.pattern.permute.xlu0 0
      %411 = vperm.xlu0 %410, %v401
      %v412 = vpop.permute.xlu0 %411
      %415 = vset.pattern.permute.xlu0 0
      %416 = vperm.xlu0 %415, %v402
      %v417 = vpop.permute.xlu0 %416
      %420 = vset.pattern.permute.xlu0 0
      %421 = vperm.xlu0 %420, %v403
      %v422 = vpop.permute.xlu0 %421
      %v428 = vunpack.c.l.b16 %v396
      %v429 = vunpack.c.l.b16 %v397
      %v430 = vunpack.c.l.b16 %v398
      %v431 = vunpack.c.l.b16 %v399
      %v432 = vpack.c.b16 %v429, %v428
      %v433 = vpack.c.b16 %v431, %v430
      %vm434 = vcmask 785408
      %v436 = vsel %vm434, %v432, 0
      %v439 = vsel %vm434, %v433, 0
      %441 = vmatprep.subr.bf16.mxu0 0
      %442 = vmatpush1.bf16.msra.mxu0 %v380
      %443 = vmatprep.subr.bf16.mxu0 0
      %444 = vmatpush1.bf16.msra.mxu0 %v381
      %445 = vmatprep.subr.bf16.mxu0 0
      %446 = vmatpush1.bf16.msra.mxu0 %v385
      %447 = vmatprep.subr.bf16.mxu0 0
      %448 = vmatpush1.bf16.msra.mxu0 %v387
      %449 = vmatprep.subr.bf16.mxu0 0
      %450 = vmatpush1.bf16.msra.mxu0 %v391
      %451 = vmatprep.subr.bf16.mxu0 0
      %452 = vmatpush1.bf16.msra.mxu0 %v393
      %453 = vmatprep.subr.bf16.mxu0 0
      %454 = vmatpush1.bf16.msra.mxu0 0
      %455 = vmatprep.subr.bf16.mxu0 0
      %456 = vmatpush1.bf16.msra.mxu0 0
      %457 = vmatprep.subr.bf16.mxu0 0
      %458 = vmatpush1.bf16.msra.mxu0 0
      %459 = vmatprep.subr.bf16.mxu0 0
      %460 = vmatpush1.bf16.msra.mxu0 0
      %461 = vmatprep.subr.bf16.mxu0 0
      %462 = vmatpush1.bf16.msra.mxu0 0
      %463 = vmatprep.subr.bf16.mxu0 0
      %464 = vmatpush1.bf16.msra.mxu0 0
      %465 = vmatprep.subr.bf16.mxu0 0
      %466 = vmatpush1.bf16.msra.mxu0 0
      %467 = vmatprep.subr.bf16.mxu0 0
      %468 = vmatpush1.bf16.msra.mxu0 0
      %469 = vmatprep.subr.bf16.mxu0 0
      %470 = vmatpush1.bf16.msra.mxu0 0
      %471 = vmatprep.subr.bf16.mxu0 0
      %472 = vmatpush1.bf16.msra.mxu0 0
      %473 = vmatprep.mubr.bf16.mxu0 0
      %474 = vmatmul.mubr.bf16.gmra.mrb[0].mxu0 %v436
      %v475 = vpop.f32.mrb[0].mxu0
      %v476 = vadd.f32 %v407, %v475
      %v477 = vpop.f32.mrb[0].mxu0
      %v478 = vpop.f32.mrb[0].mxu0
      %v479 = vadd.f32 %v412, %v478
      %v480 = vpop.f32.mrb[0].mxu0
      %481 = vmatprep.mubr.bf16.mxu0 0
      %482 = vmatmul.mubr.bf16.gmra.mrb[0].mxu0 %v439
      %v483 = vpop.f32.mrb[0].mxu0
      %v484 = vadd.f32 %v417, %v483
      %v485 = vpop.f32.mrb[0].mxu0
      %v486 = vpop.f32.mrb[0].mxu0
      %v487 = vadd.f32 %v422, %v486
      %v488 = vpop.f32.mrb[0].mxu0
      %489 = vdwg.mxu0
      %vm490 = vcmp.ge.f32.partialorder %v476, 0.0
      %vm491 = vcmp.ge.f32.partialorder %v479, 0.0
      %vm492 = vcmp.ge.f32.partialorder %v484, 0.0
      %vm493 = vcmp.ge.f32.partialorder %v487, 0.0
      %v494 = vmul.f32 %v476, 0.2
      %v495 = vmul.f32 %v479, 0.2
      %v496 = vmul.f32 %v484, 0.2
      %v497 = vmul.f32 %v487, 0.2
      %v498 = vsel %vm490, %v476, %v494
      %v499 = vsel %vm491, %v479, %v495
      %v500 = vsel %vm492, %v484, %v496
      %v501 = vsel %vm493, %v487, %v497
      %v502 = vpack.c.bf16 %v499, %v498
      %v503 = vpack.c.bf16 %v501, %v500
      %v504 = vpack.c.bf16 %v319, %v318
      %v505 = vpack.c.bf16 %v321, %v320
      %v506 = vld [vmem:[%s4] sm:$0xf]
      %v507 = vld [vmem:[%s4 + $0x4] sm:$0xf]
      %v508 = vld [vmem:[%s4 + $0x8] sm:$0xf]
      %v509 = vld [vmem:[%s4 + $0xc] sm:$0xf]
      %v510 = vld [vmem:[%s5] sm:$0xff]
      %v511 = vld [vmem:[%s5 + $0x8] sm:$0xff]
      %v512 = vld [vmem:[%s5 + $0x10] sm:$0xff]
      %v513 = vld [vmem:[%s5 + $0x18] sm:$0xff]
      %515 = vset.pattern.permute.xlu0 0
      %516 = vperm.xlu0 %515, %v510
      %v517 = vpop.permute.xlu0 %516
      %520 = vset.pattern.permute.xlu0 0
      %521 = vperm.xlu0 %520, %v511
      %v522 = vpop.permute.xlu0 %521
      %525 = vset.pattern.permute.xlu0 0
      %526 = vperm.xlu0 %525, %v512
      %v527 = vpop.permute.xlu0 %526
      %530 = vset.pattern.permute.xlu0 0
      %531 = vperm.xlu0 %530, %v513
      %v532 = vpop.permute.xlu0 %531
      %v538 = vunpack.c.l.b16 %v506
      %v539 = vunpack.c.l.b16 %v507
      %v540 = vunpack.c.l.b16 %v508
      %v541 = vunpack.c.l.b16 %v509
      %v542 = vpack.c.b16 %v539, %v538
      %v543 = vpack.c.b16 %v541, %v540
      %vm544 = vcmask 523264
      %v546 = vsel %vm544, %v542, 0
      %v549 = vsel %vm544, %v543, 0
      %551 = vmatprep.subr.bf16.mxu0 0
      %552 = vmatpush1.bf16.msra.mxu0 %v504
      %553 = vmatprep.subr.bf16.mxu0 0
      %554 = vmatpush1.bf16.msra.mxu0 %v505
      %555 = vmatprep.subr.bf16.mxu0 0
      %556 = vmatpush1.bf16.msra.mxu0 %v502
      %557 = vmatprep.subr.bf16.mxu0 0
      %558 = vmatpush1.bf16.msra.mxu0 %v503
      %559 = vmatprep.subr.bf16.mxu0 0
      %560 = vmatpush1.bf16.msra.mxu0 0
      %561 = vmatprep.subr.bf16.mxu0 0
      %562 = vmatpush1.bf16.msra.mxu0 0
      %563 = vmatprep.subr.bf16.mxu0 0
      %564 = vmatpush1.bf16.msra.mxu0 0
      %565 = vmatprep.subr.bf16.mxu0 0
      %566 = vmatpush1.bf16.msra.mxu0 0
      %567 = vmatprep.subr.bf16.mxu0 0
      %568 = vmatpush1.bf16.msra.mxu0 0
      %569 = vmatprep.subr.bf16.mxu0 0
      %570 = vmatpush1.bf16.msra.mxu0 0
      %571 = vmatprep.subr.bf16.mxu0 0
      %572 = vmatpush1.bf16.msra.mxu0 0
      %573 = vmatprep.subr.bf16.mxu0 0
      %574 = vmatpush1.bf16.msra.mxu0 0
      %575 = vmatprep.subr.bf16.mxu0 0
      %576 = vmatpush1.bf16.msra.mxu0 0
      %577 = vmatprep.subr.bf16.mxu0 0
      %578 = vmatpush1.bf16.msra.mxu0 0
      %579 = vmatprep.subr.bf16.mxu0 0
      %580 = vmatpush1.bf16.msra.mxu0 0
      %581 = vmatprep.subr.bf16.mxu0 0
      %582 = vmatpush1.bf16.msra.mxu0 0
      %583 = vmatprep.mubr.bf16.mxu0 0
      %584 = vmatmul.mubr.bf16.gmra.mrb[0].mxu0 %v546
      %v585 = vpop.f32.mrb[0].mxu0
      %v586 = vadd.f32 %v517, %v585
      %v587 = vpop.f32.mrb[0].mxu0
      %v588 = vpop.f32.mrb[0].mxu0
      %v589 = vadd.f32 %v522, %v588
      %v590 = vpop.f32.mrb[0].mxu0
      %591 = vmatprep.mubr.bf16.mxu0 0
      %592 = vmatmul.mubr.bf16.gmra.mrb[0].mxu0 %v549
      %v593 = vpop.f32.mrb[0].mxu0
      %v594 = vadd.f32 %v527, %v593
      %v595 = vpop.f32.mrb[0].mxu0
      %v596 = vpop.f32.mrb[0].mxu0
      %v597 = vadd.f32 %v532, %v596
      %v598 = vpop.f32.mrb[0].mxu0
      %599 = vdwg.mxu0
      %vm600 = vcmask 130048
      %601 = vst.msk [vmem:[%s316] sm:$0xff] %vm600, %v586
      %602 = vst.msk [vmem:[%s316 + $0x8] sm:$0xff] %vm600, %v589
      %603 = vst.msk [vmem:[%s316 + $0x10] sm:$0xff] %vm600, %v594
      %604 = vst.msk [vmem:[%s316 + $0x18] sm:$0xff] %vm600, %v597
      %p605 = scmp.lt.s32.totalorder %s21, 1
      %s606 = scalar_select %p605, %s21, 1
      %p607 = scmp.lt.s32.totalorder %s22, 0
      %s608 = scalar_select %p607, %s22, 0
      %s609 = smul.addr %s606, 4
      %s610 = sadd.s32 %s608, %s609
      %s611 = smul.addr %s610, 8
      %s612 = scalar_lea.vmem %s6, %s611
      // Predicated region
      $region45: #{resnet_block_pallas.1} parent=43 // pred_check
        %p613 = pneg %p189
      $region46: #{resnet_block_pallas.1} parent=43 // pred_check_branch
        %615 = sbr.rel (%p613) target = $region48
      $region47: #{resnet_block_pallas.1} parent=43 // pred_region
        _
      $region48: #{resnet_block_pallas.1} parent=43 // pred_fallthru
        _
    $region44: #{resnet_block_pallas.1} parent=5 // pred_fallthru
      _
    %p616 = scmp.le.s32.totalorder 2, %s12
    // Predicated region
    $region49: #{resnet_block_pallas.1} parent=5 // pred_check
      %p617 = pneg %p616
    $region50: #{resnet_block_pallas.1} parent=5 // pred_check_branch
      %619 = sbr.rel (%p617) target = $region52
    $region51: #{resnet_block_pallas.1} parent=5 // pred_region
      %s620 = ssub.s32 %s12, 2
      // Predicated region
      $region53: #{resnet_block_pallas.1} parent=51 // pred_check
        %p621 = pneg %p195
      $region54: #{resnet_block_pallas.1} parent=51 // pred_check_branch
        %623 = sbr.rel (%p621) target = $region56
      $region55: #{resnet_block_pallas.1} parent=51 // pred_region
        %p624 = scmp.lt.s32.totalorder %s23, 1
        %s625 = scalar_select %p624, %s23, 1
        %p626 = scmp.lt.s32.totalorder %s24, 0
        %s627 = scalar_select %p626, %s24, 0
        %s628 = smul.addr %s625, 4
        %s629 = sadd.s32 %s627, %s628
        %s630 = smul.addr %s629, 8
        %s631 = scalar_lea.vmem %s6, %s630
      $region56: #{resnet_block_pallas.1} parent=51 // pred_fallthru
        _
    $region52: #{resnet_block_pallas.1} parent=5 // pred_fallthru
      _
  $region6: #{resnet_block_pallas.1} parent=0 // loop_footer
    %s16 = sadd.s32 1, %s12
  $region7: #{resnet_block_pallas.1} parent=0 // loop_footer_branch
    %11 = sbr.rel target = $region3
  $region8: #{resnet_block_pallas.1} parent=0 // loop_exit
    _

</llo_original>
